<compile_context>
chip_gen: v7x
topology: tpu7x:2x2x1
jax: 0.10.0
libtpu: 0.0.40
codegen_flags: <defaults>
</compile_context>

<pallas_src>
import jax
import jax.numpy as jnp
from jax.experimental import pallas as pl
from jax.experimental.pallas import tpu as pltpu


def _make_mask_l1_kernel(TR, LANE, HWR):
    """Builds the reduction kernel for static tile parameters."""
    needs_tail = (HWR % TR) != 0

    def _fold_rows_to_8(x):
        # Sum a (TR, LANE) array into (8, LANE) using only whole-vreg,
        # tile-aligned static slices + adds (pure VPU), arranged as a
        # pairwise tree so the dependent-add chain is O(log(TR/8)).
        chunks = [x[8 * k:8 * (k + 1)] for k in range(TR // 8)]
        while len(chunks) > 1:
            nxt = []
            for a in range(0, len(chunks) - 1, 2):
                nxt.append(chunks[a] + chunks[a + 1])
            if len(chunks) % 2:
                nxt.append(chunks[-1])
            chunks = nxt
        return chunks[0]

    def kernel(p_ref, g_ref, m_ref, num_ref, den_ref):
        j = pl.program_id(1)

        @pl.when(j == 0)
        def _init():
            num_ref[...] = jnp.zeros_like(num_ref)
            den_ref[...] = jnp.zeros_like(den_ref)

        p = p_ref[0].astype(jnp.float32)   # (TR, LANE)
        g = g_ref[0].astype(jnp.float32)
        m = m_ref[0].astype(jnp.float32)

        term = jnp.abs(p - g) * m

        if needs_tail:
            rows = j * TR + jax.lax.broadcasted_iota(jnp.int32, (TR, LANE), 0)
            valid = rows < HWR
            term = jnp.where(valid, term, 0.0)
            m = jnp.where(valid, m, 0.0)

        if TR % 8 == 0 and TR > 8:
            num_c = _fold_rows_to_8(term)   # (8, LANE)
            den_c = _fold_rows_to_8(m)      # (8, LANE)
        else:
            num_c = term                    # (TR, LANE), TR == acc rows
            den_c = m

        num_ref[0] = num_ref[0] + num_c
        den_ref[0] = den_ref[0] + den_c

    return kernel


def mask_l1_loss(pred, gt, mask):
    """JAX/Pallas equivalent of MaskL1Loss.forward.

    pred : (N, C, H, W)   — only channel 0 is used
    gt   : (N, H, W)
    mask : (N, H, W)
    returns (loss, {'l1_loss': loss}) with loss a float32 scalar.
    """
    N, C, H, W = pred.shape
    HW = H * W

    lane = 0
    for cand in (1024, 512, 256, 128):
        if HW % cand == 0:
            lane = cand
            break

    if lane:
        # All reshapes below are contiguous -> free in HBM (no copies).
        HWR = HW // lane
        p3 = pred.reshape(N * C, HWR, lane)   # channel 0 of image n = row n*C
        g3 = gt.reshape(N, HWR, lane)
        m3 = mask.reshape(N, HWR, lane)
        n_grid, c_stride = N, C
    else:
        # TODO(synk): rare fallback when H*W is not a multiple of 128; the
        # channel slice + small flat pad materialize copies in HBM.
        lane = 128
        p0 = pred[:, 0].reshape(-1)
        g0 = gt.reshape(-1)
        m0 = mask.reshape(-1)
        T = p0.shape[0]
        padT = (-T) % lane
        if padT:
            p0 = jnp.pad(p0, (0, padT))
            g0 = jnp.pad(g0, (0, padT))
            m0 = jnp.pad(m0, (0, padT))
        HWR = (T + padT) // lane
        p3 = p0.reshape(1, HWR, lane)
        g3 = g0.reshape(1, HWR, lane)
        m3 = m0.reshape(1, HWR, lane)
        n_grid, c_stride = 1, 1

    # ~2 MiB f32 per input block (3 inputs x 2 pipeline buffers ~= 12 MiB),
    # inside the 32 MiB scoped-VMEM limit requested below on all of
    # v5e / v6e / v7x.  Bigger blocks -> fewer grid steps, closer to roofline.
    tr_target = max(8, (2 << 20) // (4 * lane))
    if HWR >= 8:
        TR = min((HWR // 8) * 8, tr_target)
    else:
        TR = HWR
    acc_r = 8 if TR % 8 == 0 else TR
    rb = pl.cdiv(HWR, TR)

    kernel = _make_mask_l1_kernel(TR, lane, HWR)

    num_part, den_part = pl.pallas_call(
        kernel,
        out_shape=(
            jax.ShapeDtypeStruct((n_grid, acc_r, lane), jnp.float32),
            jax.ShapeDtypeStruct((n_grid, acc_r, lane), jnp.float32),
        ),
        grid=(n_grid, rb),
        in_specs=[
            pl.BlockSpec((1, TR, lane), lambda i, j: (i * c_stride, j, 0)),
            pl.BlockSpec((1, TR, lane), lambda i, j: (i, j, 0)),
            pl.BlockSpec((1, TR, lane), lambda i, j: (i, j, 0)),
        ],
        out_specs=(
            pl.BlockSpec((1, acc_r, lane), lambda i, j: (i, 0, 0)),
            pl.BlockSpec((1, acc_r, lane), lambda i, j: (i, 0, 0)),
        ),
        compiler_params=pltpu.CompilerParams(
            dimension_semantics=("parallel", "arbitrary"),
            vmem_limit_bytes=32 * 1024 * 1024),
    )(p3, g3, m3)

    # Tiny final reductions done in plain JAX on the vreg-shaped partials.
    numerator = jnp.sum(num_part)
    mask_sum = jnp.sum(den_part)
    # PyTorch branches on mask_sum.item(); here we select with jnp.where
    # (returns mask_sum, i.e. 0.0, when the mask is empty).
    loss = jnp.where(mask_sum == 0, mask_sum, numerator / mask_sum)
    return loss, dict(l1_loss=loss)


def _ref_loss(pred, gt, mask):
    ms = mask.sum()
    return jnp.where(ms == 0, ms, (jnp.abs(pred[:, 0] - gt) * mask).sum() / ms)


if __name__ == "__main__":
    key = jax.random.PRNGKey(0)

    def make_inputs(key, N, C, H, W):
        k1, k2, k3 = jax.random.split(key, 3)
        pred = jax.random.uniform(k1, (N, C, H, W), dtype=jnp.float32)
        gt = jax.random.uniform(k2, (N, H, W), dtype=jnp.float32)
        mask = (jax.random.uniform(k3, (N, H, W)) > 0.5).astype(jnp.float32)
        return pred, gt, mask

    # Main test (module's typical small shape): lane-dense fast path.
    pred, gt, mask = make_inputs(key, 2, 4, 16, 16)
    loss, metrics = mask_l1_loss(pred, gt, mask)
    loss = jax.block_until_ready(loss)
    ref = _ref_loss(pred, gt, mask)
    assert jnp.allclose(loss, ref, rtol=1e-5, atol=1e-6), (loss, ref)
    assert jnp.allclose(metrics["l1_loss"], ref, rtol=1e-5, atol=1e-6)

    # Ragged row-tail path (HWR not a multiple of the row tile).
    key2 = jax.random.PRNGKey(1)
    pred2, gt2, mask2 = make_inputs(key2, 2, 3, 48, 24)   # HW = 1152 = 9*128
    loss2, _ = mask_l1_loss(pred2, gt2, mask2)
    loss2 = jax.block_until_ready(loss2)
    ref2 = _ref_loss(pred2, gt2, mask2)
    assert jnp.allclose(loss2, ref2, rtol=1e-5, atol=1e-6), (loss2, ref2)

    # Fallback path (H*W not a multiple of 128).
    key3 = jax.random.PRNGKey(2)
    pred3, gt3, mask3 = make_inputs(key3, 2, 2, 10, 10)
    loss3, _ = mask_l1_loss(pred3, gt3, mask3)
    loss3 = jax.block_until_ready(loss3)
    ref3 = _ref_loss(pred3, gt3, mask3)
    assert jnp.allclose(loss3, ref3, rtol=1e-5, atol=1e-6), (loss3, ref3)

    # Empty-mask branch check.
    loss0, _ = mask_l1_loss(pred, gt, jnp.zeros_like(mask))
    loss0 = jax.block_until_ready(loss0)
    assert loss0 == 0.0

    print("KERNEL_OK")
</pallas_src>

<mosaic_0001>
module attributes {stable_mosaic.version = 11 : i64} {
  func.func @kernel(%arg0: i32, %arg1: i32, %arg2: memref<1x1x256xf32, #tpu.memory_space<vmem>>, %arg3: memref<1x1x256xf32, #tpu.memory_space<vmem>>, %arg4: memref<1x1x256xf32, #tpu.memory_space<vmem>>, %arg5: memref<1x1x256xf32, #tpu.memory_space<vmem>>, %arg6: memref<1x1x256xf32, #tpu.memory_space<vmem>>) attributes {dimension_semantics = [#tpu.dimension_semantics<parallel>, #tpu.dimension_semantics<arbitrary>], iteration_bounds = array<i64: 2, 1>, scalar_prefetch = 0 : i64, scratch_operands = 0 : i64, tpu.core_type = #tpu.core_type<tc>, window_params = [{transform_indices = @transform_0, window_bounds = array<i64: 1, 1, 256>}, {transform_indices = @transform_1, window_bounds = array<i64: 1, 1, 256>}, {transform_indices = @transform_2, window_bounds = array<i64: 1, 1, 256>}, {transform_indices = @transform_3, window_bounds = array<i64: 1, 1, 256>}, {transform_indices = @transform_4, window_bounds = array<i64: 1, 1, 256>}]} {
    %c0_i32 = arith.constant 0 : i32
    %0 = arith.cmpi eq, %arg1, %c0_i32 : i32
    %1 = arith.extui %0 : i1 to i32
    %c0_i32_0 = arith.constant 0 : i32
    %2 = arith.cmpi ne, %1, %c0_i32_0 : i32
    scf.if %2 {
      %cst = arith.constant 0.000000e+00 : f32
      %24 = vector.broadcast %cst : f32 to vector<1x1x256xf32>
      %c0_21 = arith.constant 0 : index
      %c0_22 = arith.constant 0 : index
      %c0_23 = arith.constant 0 : index
      %25 = vector.load %arg5[%c0_21, %c0_22, %c0_23] : memref<1x1x256xf32, #tpu.memory_space<vmem>>, vector<1x1x256xf32>
      tpu.vector_store %arg5[%c0_21, %c0_22, %c0_23], %24 {strides = array<i32>} : memref<1x1x256xf32, #tpu.memory_space<vmem>>, vector<1x1x256xf32>,
      %cst_24 = arith.constant 0.000000e+00 : f32
      %26 = vector.broadcast %cst_24 : f32 to vector<1x1x256xf32>
      %c0_25 = arith.constant 0 : index
      %c0_26 = arith.constant 0 : index
      %c0_27 = arith.constant 0 : index
      %27 = vector.load %arg6[%c0_25, %c0_26, %c0_27] : memref<1x1x256xf32, #tpu.memory_space<vmem>>, vector<1x1x256xf32>
      tpu.vector_store %arg6[%c0_25, %c0_26, %c0_27], %26 {strides = array<i32>} : memref<1x1x256xf32, #tpu.memory_space<vmem>>, vector<1x1x256xf32>,
    } else {
    }
    %c0 = arith.constant 0 : index
    %c0_1 = arith.constant 0 : index
    %c0_2 = arith.constant 0 : index
    %3 = vector.load %arg2[%c0, %c0_1, %c0_2] : memref<1x1x256xf32, #tpu.memory_space<vmem>>, vector<1x1x256xf32>
    %4 = vector.shape_cast %3 : vector<1x1x256xf32> to vector<1x256xf32>
    %c0_3 = arith.constant 0 : index
    %c0_4 = arith.constant 0 : index
    %c0_5 = arith.constant 0 : index
    %5 = vector.load %arg3[%c0_3, %c0_4, %c0_5] : memref<1x1x256xf32, #tpu.memory_space<vmem>>, vector<1x1x256xf32>
    %6 = vector.shape_cast %5 : vector<1x1x256xf32> to vector<1x256xf32>
    %c0_6 = arith.constant 0 : index
    %c0_7 = arith.constant 0 : index
    %c0_8 = arith.constant 0 : index
    %7 = vector.load %arg4[%c0_6, %c0_7, %c0_8] : memref<1x1x256xf32, #tpu.memory_space<vmem>>, vector<1x1x256xf32>
    %8 = vector.shape_cast %7 : vector<1x1x256xf32> to vector<1x256xf32>
    %9 = arith.subf %4, %6 : vector<1x256xf32>
    %10 = math.absf %9 : vector<1x256xf32>
    %11 = arith.mulf %10, %8 : vector<1x256xf32>
    %c0_9 = arith.constant 0 : index
    %c0_10 = arith.constant 0 : index
    %c0_11 = arith.constant 0 : index
    %12 = vector.load %arg5[%c0_9, %c0_10, %c0_11] : memref<1x1x256xf32, #tpu.memory_space<vmem>>, vector<1x1x256xf32>
    %13 = vector.shape_cast %12 : vector<1x1x256xf32> to vector<1x256xf32>
    %14 = arith.addf %13, %11 : vector<1x256xf32>
    %c0_12 = arith.constant 0 : index
    %c0_13 = arith.constant 0 : index
    %c0_14 = arith.constant 0 : index
    %15 = vector.load %arg5[%c0_12, %c0_13, %c0_14] : memref<1x1x256xf32, #tpu.memory_space<vmem>>, vector<1x1x256xf32>
    %16 = vector.shape_cast %15 : vector<1x1x256xf32> to vector<1x256xf32>
    %17 = vector.shape_cast %14 : vector<1x256xf32> to vector<1x1x256xf32>
    tpu.vector_store %arg5[%c0_12, %c0_13, %c0_14], %17 {strides = array<i32>} : memref<1x1x256xf32, #tpu.memory_space<vmem>>, vector<1x1x256xf32>,
    %c0_15 = arith.constant 0 : index
    %c0_16 = arith.constant 0 : index
    %c0_17 = arith.constant 0 : index
    %18 = vector.load %arg6[%c0_15, %c0_16, %c0_17] : memref<1x1x256xf32, #tpu.memory_space<vmem>>, vector<1x1x256xf32>
    %19 = vector.shape_cast %18 : vector<1x1x256xf32> to vector<1x256xf32>
    %20 = arith.addf %19, %8 : vector<1x256xf32>
    %c0_18 = arith.constant 0 : index
    %c0_19 = arith.constant 0 : index
    %c0_20 = arith.constant 0 : index
    %21 = vector.load %arg6[%c0_18, %c0_19, %c0_20] : memref<1x1x256xf32, #tpu.memory_space<vmem>>, vector<1x1x256xf32>
    %22 = vector.shape_cast %21 : vector<1x1x256xf32> to vector<1x256xf32>
    %23 = vector.shape_cast %20 : vector<1x256xf32> to vector<1x1x256xf32>
    tpu.vector_store %arg6[%c0_18, %c0_19, %c0_20], %23 {strides = array<i32>} : memref<1x1x256xf32, #tpu.memory_space<vmem>>, vector<1x1x256xf32>,
    return
  }
  func.func @transform_0(%arg0: i32, %arg1: i32) -> (i32, i32, i32) {
    %c4_i32 = arith.constant 4 : i32
    %0 = arith.muli %arg0, %c4_i32 : i32
    %c0_i32 = arith.constant 0 : i32
    %c0_i32_0 = arith.constant 0 : i32
    return %0, %arg1, %c0_i32 : i32, i32, i32
  }
  func.func @transform_1(%arg0: i32, %arg1: i32) -> (i32, i32, i32) {
    %c0_i32 = arith.constant 0 : i32
    %c0_i32_0 = arith.constant 0 : i32
    return %arg0, %arg1, %c0_i32 : i32, i32, i32
  }
  func.func @transform_2(%arg0: i32, %arg1: i32) -> (i32, i32, i32) {
    %c0_i32 = arith.constant 0 : i32
    %c0_i32_0 = arith.constant 0 : i32
    return %arg0, %arg1, %c0_i32 : i32, i32, i32
  }
  func.func @transform_3(%arg0: i32, %arg1: i32) -> (i32, i32, i32) {
    %c0_i32 = arith.constant 0 : i32
    %c0_i32_0 = arith.constant 0 : i32
    %c0_i32_1 = arith.constant 0 : i32
    return %arg0, %c0_i32, %c0_i32_0 : i32, i32, i32
  }
  func.func @transform_4(%arg0: i32, %arg1: i32) -> (i32, i32, i32) {
    %c0_i32 = arith.constant 0 : i32
    %c0_i32_0 = arith.constant 0 : i32
    %c0_i32_1 = arith.constant 0 : i32
    return %arg0, %c0_i32, %c0_i32_0 : i32, i32, i32
  }
}

</mosaic_0001>

<llo_original>
// kernel: tpu_custom_call.1
$region0: #{tpu_custom_call.1}
  #allocation0 [shape = 'u32[]', space=smem, size = 0x4, offset = 0x4, fixed_abs, tag = 'smem constant byte address 0x4 - core index']
  #allocation1 [shape = 'u32[144,128]{1,0:T(1,128)}', space=vmem, size = 0x12000, scoped, tag = 'internal scratch']
  %s0 = inlined_call_operand.hbm [shape: f32[8,1,256], index: 0, kind: input, shape index: {}]
  %s1 = inlined_call_operand.hbm [shape: f32[2,1,256], index: 1, kind: input, shape index: {}]
  %s2 = inlined_call_operand.vmem [shape: f32[2,1,256], index: 2, kind: input, shape index: {}]
  %s3 = inlined_call_operand.hbm [shape: f32[2,1,256], index: 3, kind: output, shape index: {0}]
  %s4 = inlined_call_operand.hbm [shape: f32[2,1,256], index: 4, kind: output, shape index: {1}]
  %5 = xla_tuple %s3, %s4
  %s6 = sld [smem:[#allocation0]]
  $region65: #{tpu_custom_call.1} parent=0
    _
  %s8 = ssub.s32 1, %s6
  %s9 = scalar_select 0, %s8, %s6
  $region1: #{tpu_custom_call.1} parent=0
    #allocation2 [shape = 'u8[2048]{0}', space=vmem, size = 0x800, scoped, tag = 'input window, operand 0']
    #allocation3 [shape = 's32[2]{0}', space=sflag, size = 0x8, scoped, tag = 'scoped memory for tpu_custom_call.1']
    #allocation4 [shape = 's32[2]{0}', space=sflag, size = 0x8, scoped, tag = 'scoped memory for tpu_custom_call.1']
    #allocation5 [shape = 'u8[2048]{0}', space=vmem, size = 0x800, scoped, tag = 'input window, operand 1']
    #allocation6 [shape = 's32[2]{0}', space=sflag, size = 0x8, scoped, tag = 'scoped memory for tpu_custom_call.1']
    #allocation7 [shape = 'u8[2048]{0}', space=vmem, size = 0x800, scoped, tag = 'output window, operand 0']
    #allocation8 [shape = 'u8[2048]{0}', space=vmem, size = 0x800, scoped, tag = 'output window, operand 1']
    #allocation9 [shape = 's32[2]{0}', space=sflag, size = 0x8, scoped, tag = 'scoped memory for tpu_custom_call.1']
    %10 = vsyncpa [#allocation3], 0
    %s11 = scalar_lea.sflag [#allocation3], 1
    %12 = vsyncpa %s11, 0
    %13 = vsyncpa [#allocation6], 0
    %s14 = scalar_lea.sflag [#allocation6], 1
    %15 = vsyncpa %s14, 0
    %16 = vsyncpa [#allocation4], 0
    %s17 = scalar_lea.sflag [#allocation4], 1
    %18 = vsyncpa %s17, 0
    %19 = vsyncpa [#allocation9], 0
    %s20 = scalar_lea.sflag [#allocation9], 1
    %21 = vsyncpa %s20, 0
    loop: start=0, step=1, limit=4
    $region2: #{tpu_custom_call.1} parent=1 // loop_pre_header
      _
    $region3: #{tpu_custom_call.1} parent=1 // loop_header
      %s23 = sphi 0, %s27
      %p24 = scmp.ge.s32.totalorder %s23, 4
      %s30 = sphi 0, %s42
      %s31 = sphi 0, %s38
      %s32 = sphi 0, %s30
      %s33 = sphi 0, %s31
      %s34 = sphi 0, %s32
      %s35 = sphi 0, %s33
      %s49 = sphi 0, %s51
      %s52 = sphi 0, %s49
      %s53 = sphi 0, %s52
      %s69 = sphi 0, %s53
      %s77 = sphi 0, %s79
      %s80 = sphi 0, %s77
      %s81 = sphi 0, %s80
      %s97 = sphi 0, %s81
      %s105 = sphi 0, %s107
      %s108 = sphi 0, %s105
      %s109 = sphi 0, %s108
      %s125 = sphi 0, %s109
      %s131 = sphi 0, %s133
      %s134 = sphi 0, %s131
      %s135 = sphi 0, %s134
      %s151 = sphi 0, %s135
      %s157 = sphi 0, %s159
      %s160 = sphi 0, %s157
      %s161 = sphi 0, %s160
      %s177 = sphi 0, %s161
    $region4: #{tpu_custom_call.1} parent=1 // loop_header_branch
      %26 = sbr.rel (%p24) target = $region8
    $region5: #{tpu_custom_call.1} parent=1 // loop_body
      %s28 = ssub.s32 %s23, 1
      %s29 = ssub.s32 %s23, 2
      %s36 = sadd.s32 1, %s31
      %p37 = scmp.ge.s32.totalorder %s36, 1
      %s38 = scalar_select %p37, 0, %s36
      %s39 = sadd.s32 1, %s30
      %s40 = scalar_select %p37, %s39, %s30
      %p41 = scmp.ge.s32.totalorder %s40, 2
      %s42 = scalar_select %p41, 0, %s40
      %s43 = smul.u32 %s30, 4
      %s44 = smul.u32 %s42, 4
      %s45 = ssub.s32 %s43, %s44
      %s46 = ssub.s32 %s31, %s38
      %s47 = sor.u32 %s45, %s46
      %p48 = scmp.eq.s32.totalorder %s47, 0
      %s50 = sadd.s32 %s49, 1
      %s51 = scalar_select %p48, %s49, %s50
      %p54 = pneg %p48
      %p55 = scmp.eq.s32.totalorder %s23, 1
      %p56 = por %p54, %p55
      %p57 = scmp.ne.s32.totalorder %s49, %s52
      %p58 = scmp.eq.s32.totalorder %s23, 0
      %p59 = por %p57, %p58
      %p60 = scmp.ne.s32.totalorder %s49, %s52
      %p61 = scmp.eq.s32.totalorder %s28, 1
      %p62 = por %p60, %p61
      %p63 = scmp.ne.s32.totalorder %s52, %s53
      %p64 = scmp.eq.s32.totalorder %s28, 0
      %p65 = por %p63, %p64
      %p66 = scmp.ne.s32.totalorder %s52, %s53
      %p67 = scmp.eq.s32.totalorder %s29, 1
      %p68 = por %p66, %p67
      %p70 = scmp.ne.s32.totalorder %s53, %s69
      %p71 = scmp.eq.s32.totalorder %s29, 0
      %p72 = por %p70, %p71
      %s73 = ssub.s32 %s30, %s42
      %s74 = ssub.s32 %s31, %s38
      %s75 = sor.u32 %s73, %s74
      %p76 = scmp.eq.s32.totalorder %s75, 0
      %s78 = sadd.s32 %s77, 1
      %s79 = scalar_select %p76, %s77, %s78
      %p82 = pneg %p76
      %p83 = scmp.eq.s32.totalorder %s23, 1
      %p84 = por %p82, %p83
      %p85 = scmp.ne.s32.totalorder %s77, %s80
      %p86 = scmp.eq.s32.totalorder %s23, 0
      %p87 = por %p85, %p86
      %p88 = scmp.ne.s32.totalorder %s77, %s80
      %p89 = scmp.eq.s32.totalorder %s28, 1
      %p90 = por %p88, %p89
      %p91 = scmp.ne.s32.totalorder %s80, %s81
      %p92 = scmp.eq.s32.totalorder %s28, 0
      %p93 = por %p91, %p92
      %p94 = scmp.ne.s32.totalorder %s80, %s81
      %p95 = scmp.eq.s32.totalorder %s29, 1
      %p96 = por %p94, %p95
      %p98 = scmp.ne.s32.totalorder %s81, %s97
      %p99 = scmp.eq.s32.totalorder %s29, 0
      %p100 = por %p98, %p99
      %s101 = ssub.s32 %s30, %s42
      %s102 = ssub.s32 %s31, %s38
      %s103 = sor.u32 %s101, %s102
      %p104 = scmp.eq.s32.totalorder %s103, 0
      %s106 = sadd.s32 %s105, 1
      %s107 = scalar_select %p104, %s105, %s106
      %p110 = pneg %p104
      %p111 = scmp.eq.s32.totalorder %s23, 1
      %p112 = por %p110, %p111
      %p113 = scmp.ne.s32.totalorder %s105, %s108
      %p114 = scmp.eq.s32.totalorder %s23, 0
      %p115 = por %p113, %p114
      %p116 = scmp.ne.s32.totalorder %s105, %s108
      %p117 = scmp.eq.s32.totalorder %s28, 1
      %p118 = por %p116, %p117
      %p119 = scmp.ne.s32.totalorder %s108, %s109
      %p120 = scmp.eq.s32.totalorder %s28, 0
      %p121 = por %p119, %p120
      %p122 = scmp.ne.s32.totalorder %s108, %s109
      %p123 = scmp.eq.s32.totalorder %s29, 1
      %p124 = por %p122, %p123
      %p126 = scmp.ne.s32.totalorder %s109, %s125
      %p127 = scmp.eq.s32.totalorder %s29, 0
      %p128 = por %p126, %p127
      %s129 = ssub.s32 %s30, %s42
      %p130 = scmp.eq.s32.totalorder %s129, 0
      %s132 = sadd.s32 %s131, 1
      %s133 = scalar_select %p130, %s131, %s132
      %p136 = pneg %p130
      %p137 = scmp.eq.s32.totalorder %s23, 1
      %p138 = por %p136, %p137
      %p139 = scmp.ne.s32.totalorder %s131, %s134
      %p140 = scmp.eq.s32.totalorder %s23, 0
      %p141 = por %p139, %p140
      %p142 = scmp.ne.s32.totalorder %s131, %s134
      %p143 = scmp.eq.s32.totalorder %s28, 1
      %p144 = por %p142, %p143
      %p145 = scmp.ne.s32.totalorder %s134, %s135
      %p146 = scmp.eq.s32.totalorder %s28, 0
      %p147 = por %p145, %p146
      %p148 = scmp.ne.s32.totalorder %s134, %s135
      %p149 = scmp.eq.s32.totalorder %s29, 1
      %p150 = por %p148, %p149
      %p152 = scmp.ne.s32.totalorder %s135, %s151
      %p153 = scmp.eq.s32.totalorder %s29, 0
      %p154 = por %p152, %p153
      %s155 = ssub.s32 %s30, %s42
      %p156 = scmp.eq.s32.totalorder %s155, 0
      %s158 = sadd.s32 %s157, 1
      %s159 = scalar_select %p156, %s157, %s158
      %p162 = pneg %p156
      %p163 = scmp.eq.s32.totalorder %s23, 1
      %p164 = por %p162, %p163
      %p165 = scmp.ne.s32.totalorder %s157, %s160
      %p166 = scmp.eq.s32.totalorder %s23, 0
      %p167 = por %p165, %p166
      %p168 = scmp.ne.s32.totalorder %s157, %s160
      %p169 = scmp.eq.s32.totalorder %s28, 1
      %p170 = por %p168, %p169
      %p171 = scmp.ne.s32.totalorder %s160, %s161
      %p172 = scmp.eq.s32.totalorder %s28, 0
      %p173 = por %p171, %p172
      %p174 = scmp.ne.s32.totalorder %s160, %s161
      %p175 = scmp.eq.s32.totalorder %s29, 1
      %p176 = por %p174, %p175
      %p178 = scmp.ne.s32.totalorder %s161, %s177
      %p179 = scmp.eq.s32.totalorder %s29, 0
      %p180 = por %p178, %p179
      %p181 = scmp.le.s32.totalorder 1, %s23
      %p182 = scmp.lt.s32.totalorder %s23, 3
      %p183 = pnand %p181, %p182
      %p184 = pneg %p183
      // Predicated region
      $region9: #{tpu_custom_call.1} parent=5 // pred_check
        _
      $region10: #{tpu_custom_call.1} parent=5 // pred_check_branch
        %186 = sbr.rel (%p183) target = $region12
      $region11: #{tpu_custom_call.1} parent=5 // pred_region
        %s187 = ssub.s32 %s23, 1
      $region12: #{tpu_custom_call.1} parent=5 // pred_fallthru
        _
      %p188 = scmp.lt.s32.totalorder %s23, 2
      // Predicated region
      $region13: #{tpu_custom_call.1} parent=5 // pred_check
        %p189 = pneg %p188
      $region14: #{tpu_custom_call.1} parent=5 // pred_check_branch
        %191 = sbr.rel (%p189) target = $region16
      $region15: #{tpu_custom_call.1} parent=5 // pred_region
        // Predicated region
        $region17: #{tpu_custom_call.1} parent=15 // pred_check
          %p192 = pneg %p59
        $region18: #{tpu_custom_call.1} parent=15 // pred_check_branch
          %194 = sbr.rel (%p192) target = $region20
        $region19: #{tpu_custom_call.1} parent=15 // pred_region
          %s195 = sand.u32 %s49, 1
          %s196 = scalar_lea.sflag [#allocation3], %s195
          %s197 = sand.u32 %s49, 1
          %s198 = smul.addr %s197, 2
          %s199 = scalar_lea.vmem [#allocation2], %s198
          %s200 = smul.u32 %s30, 4
          %s202 = ssub.s32 32, 32
          %203 = vsyncadd %s196, %s202
          %s204 = smul.addr %s31, 2
          %s205 = smul.addr %s200, 2
          %s206 = sadd.s32 %s204, %s205
          %s207 = smul.addr %s206, 16
          %s208 = scalar_lea.hbm %s0, %s207
          %s210 = sshll.u32 %s199, 4
          %s211 = int_to_ptr.vmem [resolvable:$true] %s210
          %213 = dma.hbm_to_vmem [thread:$0]  %s208, 32, %s211, %s196
        $region20: #{tpu_custom_call.1} parent=15 // pred_fallthru
          _
        // Predicated region
        $region21: #{tpu_custom_call.1} parent=15 // pred_check
          %p214 = pneg %p87
        $region22: #{tpu_custom_call.1} parent=15 // pred_check_branch
          %216 = sbr.rel (%p214) target = $region24
        $region23: #{tpu_custom_call.1} parent=15 // pred_region
          %s217 = sand.u32 %s77, 1
          %s218 = scalar_lea.sflag [#allocation6], %s217
          %s219 = sand.u32 %s77, 1
          %s220 = smul.addr %s219, 2
          %s221 = scalar_lea.vmem [#allocation5], %s220
          %s223 = ssub.s32 32, 32
          %224 = vsyncadd %s218, %s223
          %s225 = smul.addr %s31, 2
          %s226 = smul.addr %s30, 2
          %s227 = sadd.s32 %s225, %s226
          %s228 = smul.addr %s227, 16
          %s229 = scalar_lea.hbm %s1, %s228
          %s231 = sshll.u32 %s221, 4
          %s232 = int_to_ptr.vmem [resolvable:$true] %s231
          %234 = dma.hbm_to_vmem [thread:$0]  %s229, 32, %s232, %s218
        $region24: #{tpu_custom_call.1} parent=15 // pred_fallthru
          _
        // Predicated region
        $region25: #{tpu_custom_call.1} parent=15 // pred_check
          %p235 = pneg %p115
        $region26: #{tpu_custom_call.1} parent=15 // pred_check_branch
          %237 = sbr.rel (%p235) target = $region28
        $region27: #{tpu_custom_call.1} parent=15 // pred_region
          %p238 = scmp.lt.s32.totalorder %s30, 1
          %s239 = scalar_select %p238, %s30, 1
          %p240 = scmp.lt.s32.totalorder %s31, 0
          %s241 = scalar_select %p240, %s31, 0
          %s242 = smul.addr %s241, 2
          %s243 = smul.addr %s239, 2
          %s244 = sadd.s32 %s242, %s243
          %s245 = scalar_lea.vmem %s2, %s244
        $region28: #{tpu_custom_call.1} parent=15 // pred_fallthru
          _
      $region16: #{tpu_custom_call.1} parent=5 // pred_fallthru
        _
      %p246 = scmp.le.s32.totalorder 1, %s23
      %p247 = scmp.lt.s32.totalorder %s23, 3
      %p248 = pnand %p246, %p247
      %p249 = pneg %p248
      // Predicated region
      $region29: #{tpu_custom_call.1} parent=5 // pred_check
        _
      $region30: #{tpu_custom_call.1} parent=5 // pred_check_branch
        %251 = sbr.rel (%p248) target = $region32
      $region31: #{tpu_custom_call.1} parent=5 // pred_region
        %s252 = ssub.s32 %s23, 1
        %s253 = sand.u32 %s52, 1
        %s254 = scalar_lea.sflag [#allocation3], %s253
        %s255 = sand.u32 %s52, 1
        %s256 = smul.addr %s255, 2
        %s257 = scalar_lea.vmem [#allocation2], %s256
        // Predicated region
        $region33: #{tpu_custom_call.1} parent=31 // pred_check
          %p258 = pneg %p65
        $region34: #{tpu_custom_call.1} parent=31 // pred_check_branch
          %260 = sbr.rel (%p258) target = $region36
        $region35: #{tpu_custom_call.1} parent=31 // pred_region
          %261 = dma.done %s254, 32
        $region36: #{tpu_custom_call.1} parent=31 // pred_fallthru
          _
        %s262 = sand.u32 %s80, 1
        %s263 = scalar_lea.sflag [#allocation6], %s262
        %s264 = sand.u32 %s80, 1
        %s265 = smul.addr %s264, 2
        %s266 = scalar_lea.vmem [#allocation5], %s265
        // Predicated region
        $region37: #{tpu_custom_call.1} parent=31 // pred_check
          %p267 = pneg %p93
        $region38: #{tpu_custom_call.1} parent=31 // pred_check_branch
          %269 = sbr.rel (%p267) target = $region40
        $region39: #{tpu_custom_call.1} parent=31 // pred_region
          %270 = dma.done %s263, 32
        $region40: #{tpu_custom_call.1} parent=31 // pred_fallthru
          _
        %s271 = sand.u32 %s52, 1
        %s272 = scalar_lea.sflag [#allocation3], %s271
        %s273 = sand.u32 %s52, 1
        %s274 = smul.addr %s273, 2
        %s275 = scalar_lea.vmem [#allocation2], %s274
        %p276 = pneg %p65
        %p277 = pneg %p62
        %s278 = sand.u32 %s80, 1
        %s279 = scalar_lea.sflag [#allocation6], %s278
        %s280 = sand.u32 %s80, 1
        %s281 = smul.addr %s280, 2
        %s282 = scalar_lea.vmem [#allocation5], %s281
        %p283 = pneg %p93
        %p284 = pneg %p90
        %p285 = scmp.lt.s32.totalorder %s32, 1
        %s286 = scalar_select %p285, %s32, 1
        %p287 = scmp.lt.s32.totalorder %s33, 0
        %s288 = scalar_select %p287, %s33, 0
        %s289 = smul.addr %s288, 2
        %s290 = smul.addr %s286, 2
        %s291 = sadd.s32 %s289, %s290
        %s292 = scalar_lea.vmem %s2, %s291
        %p293 = pneg %p121
        %p294 = pneg %p118
        %p295 = pneg %p147
        %p296 = pneg %p144
        %s297 = sand.u32 %s134, 1
        %s298 = scalar_lea.sflag [#allocation4], %s297
        %s299 = sand.u32 %s134, 1
        %s300 = smul.addr %s299, 2
        %s301 = scalar_lea.vmem [#allocation7], %s300
        %p302 = pneg %p173
        %p303 = pneg %p170
        %s304 = sand.u32 %s160, 1
        %s305 = scalar_lea.sflag [#allocation9], %s304
        %s306 = sand.u32 %s160, 1
        %s307 = smul.addr %s306, 2
        %s308 = scalar_lea.vmem [#allocation8], %s307
        %s309 = smul.u32 %s32, 4
        %p310 = scmp.lt.s32.totalorder %s32, 1
        %s311 = scalar_select %p310, %s32, 1
        %p312 = scmp.lt.s32.totalorder %s33, 0
        %s313 = scalar_select %p312, %s33, 0
        %s314 = smul.addr %s313, 2
        %s315 = smul.addr %s311, 2
        %s316 = sadd.s32 %s314, %s315
        %s317 = scalar_lea.vmem %s2, %s316
        %p318 = scmp.eq.s32.totalorder %s33, 0
        // Predicated region
        $region41: #{tpu_custom_call.1} parent=31 // pred_check
          %p319 = pneg %p318
        $region42: #{tpu_custom_call.1} parent=31 // pred_check_branch
          %321 = sbr.rel (%p319) target = $region44
        $region43: #{tpu_custom_call.1} parent=31 // pred_region
          %v322 = vlaneseq
          %vm323 = vcmp.ge.s32.totalorder %v322, 0
          %vm324 = vcmp.lt.s32.totalorder %v322, 256
          %vm325 = vmand %vm323, %vm324
          %326 = vst.msk [vmem:[%s301] sm:$0x3] %vm325, 0.0
          %327 = vst.msk [vmem:[%s308] sm:$0x3] %vm325, 0.0
        $region44: #{tpu_custom_call.1} parent=31 // pred_fallthru
          _
        %v328 = vld [vmem:[%s257] sm:$0x3]
        %v329 = vld [vmem:[%s266] sm:$0x3]
        %v330 = vld [vmem:[%s317] sm:$0x3]
        %v331 = vsub.f32 %v328, %v329
        %v332 = vand.u32 2147483647, %v331
        %v333 = vmul.f32 %v332, %v330
        %v334 = vld [vmem:[%s301] sm:$0x3]
        %v335 = vadd.f32 %v334, %v333
        %v336 = vlaneseq
        %vm337 = vcmp.ge.s32.totalorder %v336, 0
        %vm338 = vcmp.lt.s32.totalorder %v336, 256
        %vm339 = vmand %vm337, %vm338
        %340 = vst.msk [vmem:[%s301] sm:$0x3] %vm339, %v335
        %v341 = vld [vmem:[%s308] sm:$0x3]
        %v342 = vadd.f32 %v341, %v330
        %343 = vst.msk [vmem:[%s308] sm:$0x3] %vm339, %v342
        %s344 = sand.u32 %s134, 1
        %s345 = scalar_lea.sflag [#allocation4], %s344
        %s346 = sand.u32 %s134, 1
        %s347 = smul.addr %s346, 2
        %s348 = scalar_lea.vmem [#allocation7], %s347
        %s349 = sand.u32 %s160, 1
        %s350 = scalar_lea.sflag [#allocation9], %s349
        %s351 = sand.u32 %s160, 1
        %s352 = smul.addr %s351, 2
        %s353 = scalar_lea.vmem [#allocation8], %s352
        // Predicated region
        $region45: #{tpu_custom_call.1} parent=31 // pred_check
          %p354 = pneg %p144
        $region46: #{tpu_custom_call.1} parent=31 // pred_check_branch
          %356 = sbr.rel (%p354) target = $region48
        $region47: #{tpu_custom_call.1} parent=31 // pred_region
          %s358 = ssub.s32 32, 32
          %359 = vsyncadd %s345, %s358
          %s360 = smul.addr %s32, 2
          %s361 = smul.addr %s360, 16
          %s362 = scalar_lea.hbm %s3, %s361
          %s364 = sshll.u32 %s348, 4
          %s365 = int_to_ptr.vmem [resolvable:$true] %s364
          %367 = dma.vmem_to_hbm [thread:$0]  %s365, 32, %s362, %s345
        $region48: #{tpu_custom_call.1} parent=31 // pred_fallthru
          _
        // Predicated region
        $region49: #{tpu_custom_call.1} parent=31 // pred_check
          %p368 = pneg %p170
        $region50: #{tpu_custom_call.1} parent=31 // pred_check_branch
          %370 = sbr.rel (%p368) target = $region52
        $region51: #{tpu_custom_call.1} parent=31 // pred_region
          %s372 = ssub.s32 32, 32
          %373 = vsyncadd %s350, %s372
          %s374 = smul.addr %s32, 2
          %s375 = smul.addr %s374, 16
          %s376 = scalar_lea.hbm %s4, %s375
          %s378 = sshll.u32 %s353, 4
          %s379 = int_to_ptr.vmem [resolvable:$true] %s378
          %381 = dma.vmem_to_hbm [thread:$0]  %s379, 32, %s376, %s350
        $region52: #{tpu_custom_call.1} parent=31 // pred_fallthru
          _
      $region32: #{tpu_custom_call.1} parent=5 // pred_fallthru
        _
      %p382 = scmp.le.s32.totalorder 2, %s23
      // Predicated region
      $region53: #{tpu_custom_call.1} parent=5 // pred_check
        %p383 = pneg %p382
      $region54: #{tpu_custom_call.1} parent=5 // pred_check_branch
        %385 = sbr.rel (%p383) target = $region56
      $region55: #{tpu_custom_call.1} parent=5 // pred_region
        %s386 = ssub.s32 %s23, 2
        // Predicated region
        $region57: #{tpu_custom_call.1} parent=55 // pred_check
          %p387 = pneg %p150
        $region58: #{tpu_custom_call.1} parent=55 // pred_check_branch
          %389 = sbr.rel (%p387) target = $region60
        $region59: #{tpu_custom_call.1} parent=55 // pred_region
          %s390 = sand.u32 %s135, 1
          %s391 = scalar_lea.sflag [#allocation4], %s390
          %s392 = sand.u32 %s135, 1
          %s393 = smul.addr %s392, 2
          %s394 = scalar_lea.vmem [#allocation7], %s393
          %395 = dma.done %s391, 32
        $region60: #{tpu_custom_call.1} parent=55 // pred_fallthru
          _
        // Predicated region
        $region61: #{tpu_custom_call.1} parent=55 // pred_check
          %p396 = pneg %p176
        $region62: #{tpu_custom_call.1} parent=55 // pred_check_branch
          %398 = sbr.rel (%p396) target = $region64
        $region63: #{tpu_custom_call.1} parent=55 // pred_region
          %s399 = sand.u32 %s161, 1
          %s400 = scalar_lea.sflag [#allocation9], %s399
          %s401 = sand.u32 %s161, 1
          %s402 = smul.addr %s401, 2
          %s403 = scalar_lea.vmem [#allocation8], %s402
          %404 = dma.done %s400, 32
        $region64: #{tpu_custom_call.1} parent=55 // pred_fallthru
          _
      $region56: #{tpu_custom_call.1} parent=5 // pred_fallthru
        _
    $region6: #{tpu_custom_call.1} parent=1 // loop_footer
      %s27 = sadd.s32 1, %s23
    $region7: #{tpu_custom_call.1} parent=1 // loop_footer_branch
      %22 = sbr.rel target = $region3
    $region8: #{tpu_custom_call.1} parent=1 // loop_exit
      _
    %405 = vsyncpa [#allocation3], 1
    %s406 = scalar_lea.sflag [#allocation3], 1
    %407 = vsyncpa %s406, 1
    %408 = vsyncpa [#allocation6], 1
    %s409 = scalar_lea.sflag [#allocation6], 1
    %410 = vsyncpa %s409, 1
    %411 = vsyncpa [#allocation4], 1
    %s412 = scalar_lea.sflag [#allocation4], 1
    %413 = vsyncpa %s412, 1
    %414 = vsyncpa [#allocation9], 1
    %s415 = scalar_lea.sflag [#allocation9], 1
    %416 = vsyncpa %s415, 1

</llo_original>
